<compile_context>
chip_gen: v7x
topology: tpu7x:2x2x1
jax: 0.10.0
libtpu: 0.0.40
codegen_flags: <defaults>
</compile_context>

<pallas_src>
import jax
import jax.numpy as jnp
from jax.experimental import pallas as pl
from jax.experimental.pallas import tpu as pltpu


def _linear_t_kernel(w_ref, b_ref, xt_ref, yt_ref):
    # w_ref:  (Dout, Din)  -- resident across all grid steps (index map -> (0, 0))
    # b_ref:  (Dout, 1)    -- resident; broadcasts along the lane (batch) axis
    # xt_ref: (Din, tb)    -- current batch tile, batch on the 128-lane axis
    # yt_ref: (Dout, tb)   -- lane-dense output tile
    acc = jnp.dot(w_ref[...], xt_ref[...], preferred_element_type=jnp.float32)
    yt_ref[...] = (acc + b_ref[...]).astype(yt_ref.dtype)


def linear_pallas(x, w, b, *, tb=1024):
    """y = x @ w.T + b   (w is (Dout, Din), PyTorch Linear layout; b is (Dout,)).

    Internally computes y.T = w @ x.T tiled over the batch so the batch axis
    is lane-dense, then transposes back in the wrapper (layout plumbing only).
    """
    B, Din = x.shape
    Dout, _ = w.shape

    # Batch tile: a multiple of 128 lanes (default 1024 rows of f32 is tiny in
    # VMEM: ~40 KiB per double-buffered tile pair, safe even on v7x's 64 MiB).
    # If the whole batch is smaller than one tile, fall back to a single
    # full-array block (block_shape == array shape satisfies the tiling rule).
    tb_eff = tb if B >= tb else B
    grid = (pl.cdiv(B, tb_eff),)

    xt = x.T                      # (Din, B): wrapper-side layout plumbing
    b2 = b.reshape(Dout, 1)

    yt = pl.pallas_call(
        _linear_t_kernel,
        out_shape=jax.ShapeDtypeStruct((Dout, B), x.dtype),
        grid_spec=pltpu.PrefetchScalarGridSpec(
            num_scalar_prefetch=0,
            grid=grid,
            in_specs=[
                pl.BlockSpec((Dout, Din), lambda i: (0, 0)),    # W: resident
                pl.BlockSpec((Dout, 1), lambda i: (0, 0)),      # bias: resident
                pl.BlockSpec((Din, tb_eff), lambda i: (0, i)),  # x.T batch tile
            ],
            out_specs=pl.BlockSpec((Dout, tb_eff), lambda i: (0, i)),
        ),
        compiler_params=pltpu.CompilerParams(
            # Purely data-parallel batch axis -> megacore sharding on v7x;
            # harmless on v5e/v6e.
            dimension_semantics=("parallel",),
        ),
    )(w, b2, xt)

    return yt.T                   # back to (B, Dout), matching PyTorch output


class NetPallas:
    """JAX/Pallas equivalent of the PyTorch `Net` (nn.Linear(10, 10))."""

    def __init__(self, key):
        in_features, out_features = 10, 10
        k_w, k_b = jax.random.split(key)
        # Match PyTorch default Linear init: U(-1/sqrt(in), 1/sqrt(in)).
        bound = 1.0 / (in_features ** 0.5)
        # PyTorch weight layout (out_features, in_features); used directly by
        # the kernel (it computes W @ x.T, i.e. exactly x @ W.T transposed).
        self.w = jax.random.uniform(
            k_w, (out_features, in_features), jnp.float32, -bound, bound
        )
        self.b = jax.random.uniform(
            k_b, (out_features,), jnp.float32, -bound, bound
        )

    def __call__(self, x, *, tb=1024):
        return linear_pallas(x, self.w, self.b, tb=tb)


if __name__ == "__main__":
    key = jax.random.PRNGKey(0)
    k_param, k_x = jax.random.split(key)

    net = NetPallas(k_param)

    # Batch chosen as a multiple of 128 so the lane-dense, multi-tile grid
    # path is actually exercised (tb=128 -> grid of 2 steps).
    batch = 256
    x = jax.random.normal(k_x, (batch, 10), jnp.float32)

    y = net(x, tb=128)
    jax.block_until_ready(y)

    # Sanity check against plain-JAX reference (PyTorch semantics: x @ W.T + b).
    y_ref = x @ net.w.T + net.b
    assert y.shape == (batch, 10)
    assert jnp.allclose(y, y_ref, atol=1e-5, rtol=1e-5)

    print("KERNEL_OK")
</pallas_src>

<mosaic_0001>
module attributes {stable_mosaic.version = 11 : i64} {
  func.func @_linear_t_kernel(%arg0: i32, %arg1: memref<10x10xf32, #tpu.memory_space<vmem>>, %arg2: memref<10x1xf32, #tpu.memory_space<vmem>>, %arg3: memref<10x128xf32, #tpu.memory_space<vmem>>, %arg4: memref<10x128xf32, #tpu.memory_space<vmem>>) attributes {dimension_semantics = [#tpu.dimension_semantics<parallel>], iteration_bounds = array<i64: 2>, scalar_prefetch = 0 : i64, scratch_operands = 0 : i64, tpu.core_type = #tpu.core_type<tc>, window_params = [{pipeline_mode = #tpu.pipeline_mode<synchronous>, transform_indices = @transform_0, window_bounds = array<i64: 10, 10>}, {pipeline_mode = #tpu.pipeline_mode<synchronous>, transform_indices = @transform_1, window_bounds = array<i64: 10, 1>}, {transform_indices = @transform_2, window_bounds = array<i64: 10, 128>}, {transform_indices = @transform_3, window_bounds = array<i64: 10, 128>}]} {
    %c0 = arith.constant 0 : index
    %c0_0 = arith.constant 0 : index
    %0 = vector.load %arg1[%c0, %c0_0] : memref<10x10xf32, #tpu.memory_space<vmem>>, vector<10x10xf32>
    %c0_1 = arith.constant 0 : index
    %c0_2 = arith.constant 0 : index
    %1 = vector.load %arg3[%c0_1, %c0_2] : memref<10x128xf32, #tpu.memory_space<vmem>>, vector<10x128xf32>
    %cst = arith.constant dense<0.000000e+00> : vector<10x128xf32>
    %2 = tpu.matmul %0, %1, %cst {dimension_numbers = #tpu.dot_dimension_numbers<[1], [0], [0], [1], [0, 0, 1, 1], [], []>} : vector<10x10xf32>, vector<10x128xf32>, vector<10x128xf32> -> vector<10x128xf32>
    %c0_3 = arith.constant 0 : index
    %c0_4 = arith.constant 0 : index
    %3 = vector.load %arg2[%c0_3, %c0_4] : memref<10x1xf32, #tpu.memory_space<vmem>>, vector<10x1xf32>
    %4 = vector.broadcast %3 : vector<10x1xf32> to vector<10x128xf32>
    %5 = arith.addf %2, %4 : vector<10x128xf32>
    %c0_5 = arith.constant 0 : index
    %c0_6 = arith.constant 0 : index
    %6 = vector.load %arg4[%c0_5, %c0_6] : memref<10x128xf32, #tpu.memory_space<vmem>>, vector<10x128xf32>
    tpu.vector_store %arg4[%c0_5, %c0_6], %5 {strides = array<i32>} : memref<10x128xf32, #tpu.memory_space<vmem>>, vector<10x128xf32>,
    return
  }
  func.func @transform_0(%arg0: i32) -> (i32, i32) {
    %c0_i32 = arith.constant 0 : i32
    %c0_i32_0 = arith.constant 0 : i32
    %c0_i32_1 = arith.constant 0 : i32
    return %c0_i32, %c0_i32_0 : i32, i32
  }
  func.func @transform_1(%arg0: i32) -> (i32, i32) {
    %c0_i32 = arith.constant 0 : i32
    %c0_i32_0 = arith.constant 0 : i32
    %c0_i32_1 = arith.constant 0 : i32
    return %c0_i32, %c0_i32_0 : i32, i32
  }
  func.func @transform_2(%arg0: i32) -> (i32, i32) {
    %c0_i32 = arith.constant 0 : i32
    %c0_i32_0 = arith.constant 0 : i32
    return %c0_i32, %arg0 : i32, i32
  }
  func.func @transform_3(%arg0: i32) -> (i32, i32) {
    %c0_i32 = arith.constant 0 : i32
    %c0_i32_0 = arith.constant 0 : i32
    return %c0_i32, %arg0 : i32, i32
  }
}

</mosaic_0001>

<llo_original>
// kernel: tpu_custom_call.1
$region0: #{tpu_custom_call.1}
  #allocation0 [shape = 'u32[]', space=smem, size = 0x4, offset = 0x4, fixed_abs, tag = 'smem constant byte address 0x4 - core index']
  #allocation1 [shape = 'u32[144,128]{1,0:T(1,128)}', space=vmem, size = 0x12000, scoped, tag = 'internal scratch']
  %s0 = inlined_call_operand.vmem [shape: f32[10,10], index: 0, kind: input, shape index: {}]
  %s1 = inlined_call_operand.vmem [shape: f32[10,1], index: 1, kind: input, shape index: {}]
  %s2 = inlined_call_operand.hbm [shape: f32[10,256], index: 2, kind: input, shape index: {}]
  %s3 = inlined_call_operand.hbm [shape: f32[10,256], index: 3, kind: output, shape index: {}]
  %s4 = sld [smem:[#allocation0]]
  $region49: #{tpu_custom_call.1} parent=0
    _
  %s6 = ssub.s32 1, %s4
  %s7 = scalar_select 0, %s6, %s4
  $region1: #{tpu_custom_call.1} parent=0
    #allocation2 [shape = 'u8[16384]{0}', space=vmem, size = 0x4000, scoped, tag = 'input window, operand 2']
    #allocation3 [shape = 's32[2]{0}', space=sflag, size = 0x8, scoped, tag = 'scoped memory for tpu_custom_call.1']
    #allocation4 [shape = 's32[2]{0}', space=sflag, size = 0x8, scoped, tag = 'scoped memory for tpu_custom_call.1']
    #allocation5 [shape = 'u8[16384]{0}', space=vmem, size = 0x4000, scoped, tag = 'output window, operand 0']
    %8 = vsyncpa [#allocation3], 0
    %s9 = scalar_lea.sflag [#allocation3], 1
    %10 = vsyncpa %s9, 0
    %11 = vsyncpa [#allocation4], 0
    %s12 = scalar_lea.sflag [#allocation4], 1
    %13 = vsyncpa %s12, 0
    loop: start=0, step=1, limit=4
    $region2: #{tpu_custom_call.1} parent=1 // loop_pre_header
      _
    $region3: #{tpu_custom_call.1} parent=1 // loop_header
      %s15 = sphi 0, %s19
      %p16 = scmp.ge.s32.totalorder %s15, 4
      %s23 = sphi 0, %s23
      %s25 = sphi 0, %s23
      %s26 = sphi 0, %s25
      %s40 = sphi 0, %s26
      %s44 = sphi 0, %s44
      %s46 = sphi 0, %s44
      %s47 = sphi 0, %s46
      %s61 = sphi 0, %s47
      %s67 = sphi 0, %s69
      %s70 = sphi 0, %s67
      %s71 = sphi 0, %s70
      %s87 = sphi 0, %s71
      %s93 = sphi 0, %s95
      %s96 = sphi 0, %s93
      %s97 = sphi 0, %s96
      %s113 = sphi 0, %s97
    $region4: #{tpu_custom_call.1} parent=1 // loop_header_branch
      %18 = sbr.rel (%p16) target = $region8
    $region5: #{tpu_custom_call.1} parent=1 // loop_body
      %s20 = ssub.s32 %s15, 1
      %s21 = ssub.s32 %s15, 2
      %s22 = sadd.s32 %s15, 1
      %s24 = sadd.s32 %s23, 1
      %p27 = scmp.eq.s32.totalorder %s15, 1
      %p28 = scmp.ne.s32.totalorder %s23, %s25
      %p29 = scmp.eq.s32.totalorder %s15, 0
      %p30 = por %p28, %p29
      %p31 = scmp.ne.s32.totalorder %s23, %s25
      %p32 = scmp.eq.s32.totalorder %s20, 1
      %p33 = por %p31, %p32
      %p34 = scmp.ne.s32.totalorder %s25, %s26
      %p35 = scmp.eq.s32.totalorder %s20, 0
      %p36 = por %p34, %p35
      %p37 = scmp.ne.s32.totalorder %s25, %s26
      %p38 = scmp.eq.s32.totalorder %s21, 1
      %p39 = por %p37, %p38
      %p41 = scmp.ne.s32.totalorder %s26, %s40
      %p42 = scmp.eq.s32.totalorder %s21, 0
      %p43 = por %p41, %p42
      %s45 = sadd.s32 %s44, 1
      %p48 = scmp.eq.s32.totalorder %s15, 1
      %p49 = scmp.ne.s32.totalorder %s44, %s46
      %p50 = scmp.eq.s32.totalorder %s15, 0
      %p51 = por %p49, %p50
      %p52 = scmp.ne.s32.totalorder %s44, %s46
      %p53 = scmp.eq.s32.totalorder %s20, 1
      %p54 = por %p52, %p53
      %p55 = scmp.ne.s32.totalorder %s46, %s47
      %p56 = scmp.eq.s32.totalorder %s20, 0
      %p57 = por %p55, %p56
      %p58 = scmp.ne.s32.totalorder %s46, %s47
      %p59 = scmp.eq.s32.totalorder %s21, 1
      %p60 = por %p58, %p59
      %p62 = scmp.ne.s32.totalorder %s47, %s61
      %p63 = scmp.eq.s32.totalorder %s21, 0
      %p64 = por %p62, %p63
      %s65 = ssub.s32 %s15, %s22
      %p66 = scmp.eq.s32.totalorder %s65, 0
      %s68 = sadd.s32 %s67, 1
      %s69 = scalar_select %p66, %s67, %s68
      %p72 = pneg %p66
      %p73 = scmp.eq.s32.totalorder %s15, 1
      %p74 = por %p72, %p73
      %p75 = scmp.ne.s32.totalorder %s67, %s70
      %p76 = scmp.eq.s32.totalorder %s15, 0
      %p77 = por %p75, %p76
      %p78 = scmp.ne.s32.totalorder %s67, %s70
      %p79 = scmp.eq.s32.totalorder %s20, 1
      %p80 = por %p78, %p79
      %p81 = scmp.ne.s32.totalorder %s70, %s71
      %p82 = scmp.eq.s32.totalorder %s20, 0
      %p83 = por %p81, %p82
      %p84 = scmp.ne.s32.totalorder %s70, %s71
      %p85 = scmp.eq.s32.totalorder %s21, 1
      %p86 = por %p84, %p85
      %p88 = scmp.ne.s32.totalorder %s71, %s87
      %p89 = scmp.eq.s32.totalorder %s21, 0
      %p90 = por %p88, %p89
      %s91 = ssub.s32 %s15, %s22
      %p92 = scmp.eq.s32.totalorder %s91, 0
      %s94 = sadd.s32 %s93, 1
      %s95 = scalar_select %p92, %s93, %s94
      %p98 = pneg %p92
      %p99 = scmp.eq.s32.totalorder %s15, 1
      %p100 = por %p98, %p99
      %p101 = scmp.ne.s32.totalorder %s93, %s96
      %p102 = scmp.eq.s32.totalorder %s15, 0
      %p103 = por %p101, %p102
      %p104 = scmp.ne.s32.totalorder %s93, %s96
      %p105 = scmp.eq.s32.totalorder %s20, 1
      %p106 = por %p104, %p105
      %p107 = scmp.ne.s32.totalorder %s96, %s97
      %p108 = scmp.eq.s32.totalorder %s20, 0
      %p109 = por %p107, %p108
      %p110 = scmp.ne.s32.totalorder %s96, %s97
      %p111 = scmp.eq.s32.totalorder %s21, 1
      %p112 = por %p110, %p111
      %p114 = scmp.ne.s32.totalorder %s97, %s113
      %p115 = scmp.eq.s32.totalorder %s21, 0
      %p116 = por %p114, %p115
      %p117 = scmp.le.s32.totalorder 1, %s15
      %p118 = scmp.lt.s32.totalorder %s15, 3
      %p119 = pnand %p117, %p118
      %p120 = pneg %p119
      // Predicated region
      $region9: #{tpu_custom_call.1} parent=5 // pred_check
        _
      $region10: #{tpu_custom_call.1} parent=5 // pred_check_branch
        %122 = sbr.rel (%p119) target = $region12
      $region11: #{tpu_custom_call.1} parent=5 // pred_region
        %s123 = ssub.s32 %s15, 1
        // Predicated region
        $region13: #{tpu_custom_call.1} parent=11 // pred_check
          %p124 = pneg %p36
        $region14: #{tpu_custom_call.1} parent=11 // pred_check_branch
          %126 = sbr.rel (%p124) target = $region16
        $region15: #{tpu_custom_call.1} parent=11 // pred_region
          _
        $region16: #{tpu_custom_call.1} parent=11 // pred_fallthru
          _
        // Predicated region
        $region17: #{tpu_custom_call.1} parent=11 // pred_check
          %p127 = pneg %p57
        $region18: #{tpu_custom_call.1} parent=11 // pred_check_branch
          %129 = sbr.rel (%p127) target = $region20
        $region19: #{tpu_custom_call.1} parent=11 // pred_region
          _
        $region20: #{tpu_custom_call.1} parent=11 // pred_fallthru
          _
      $region12: #{tpu_custom_call.1} parent=5 // pred_fallthru
        _
      %p130 = scmp.lt.s32.totalorder %s15, 2
      // Predicated region
      $region21: #{tpu_custom_call.1} parent=5 // pred_check
        %p131 = pneg %p130
      $region22: #{tpu_custom_call.1} parent=5 // pred_check_branch
        %133 = sbr.rel (%p131) target = $region24
      $region23: #{tpu_custom_call.1} parent=5 // pred_region
        // Predicated region
        $region25: #{tpu_custom_call.1} parent=23 // pred_check
          %p134 = pneg %p77
        $region26: #{tpu_custom_call.1} parent=23 // pred_check_branch
          %136 = sbr.rel (%p134) target = $region28
        $region27: #{tpu_custom_call.1} parent=23 // pred_region
          %s137 = sand.u32 %s67, 1
          %s138 = scalar_lea.sflag [#allocation3], %s137
          %s139 = sand.u32 %s67, 1
          %s140 = smul.addr %s139, 16
          %s141 = scalar_lea.vmem [#allocation2], %s140
          %s143 = ssub.s32 256, 256
          %144 = vsyncadd %s138, %s143
          %s145 = smul.addr %s15, 128
          %s146 = scalar_lea.hbm %s2, %s145
          %s147 = sshll.u32 %s141, 4
          %s148 = int_to_ptr.vmem [resolvable:$true] %s147
          %153 = dma.hbm_to_vmem [thread:$0]  %s146, 256, %s148, %s138, 256, 128, 8
        $region28: #{tpu_custom_call.1} parent=23 // pred_fallthru
          _
      $region24: #{tpu_custom_call.1} parent=5 // pred_fallthru
        _
      %p154 = scmp.le.s32.totalorder 1, %s15
      %p155 = scmp.lt.s32.totalorder %s15, 3
      %p156 = pnand %p154, %p155
      %p157 = pneg %p156
      // Predicated region
      $region29: #{tpu_custom_call.1} parent=5 // pred_check
        _
      $region30: #{tpu_custom_call.1} parent=5 // pred_check_branch
        %159 = sbr.rel (%p156) target = $region32
      $region31: #{tpu_custom_call.1} parent=5 // pred_region
        %s160 = ssub.s32 %s15, 1
        %s161 = sand.u32 %s70, 1
        %s162 = scalar_lea.sflag [#allocation3], %s161
        %s163 = sand.u32 %s70, 1
        %s164 = smul.addr %s163, 16
        %s165 = scalar_lea.vmem [#allocation2], %s164
        // Predicated region
        $region33: #{tpu_custom_call.1} parent=31 // pred_check
          %p166 = pneg %p83
        $region34: #{tpu_custom_call.1} parent=31 // pred_check_branch
          %168 = sbr.rel (%p166) target = $region36
        $region35: #{tpu_custom_call.1} parent=31 // pred_region
          %169 = dma.done %s162, 256
        $region36: #{tpu_custom_call.1} parent=31 // pred_fallthru
          _
        %p170 = pneg %p36
        %p171 = pneg %p33
        %p172 = pneg %p57
        %p173 = pneg %p54
        %s174 = sand.u32 %s70, 1
        %s175 = scalar_lea.sflag [#allocation3], %s174
        %s176 = sand.u32 %s70, 1
        %s177 = smul.addr %s176, 16
        %s178 = scalar_lea.vmem [#allocation2], %s177
        %p179 = pneg %p83
        %p180 = pneg %p80
        %p181 = pneg %p109
        %p182 = pneg %p106
        %s183 = sand.u32 %s96, 1
        %s184 = scalar_lea.sflag [#allocation4], %s183
        %s185 = sand.u32 %s96, 1
        %s186 = smul.addr %s185, 16
        %s187 = scalar_lea.vmem [#allocation5], %s186
        %v188 = vld [vmem:[%s0] sm:$0xff]
        %v189 = vld [vmem:[%s0 + $0x8] sm:$0x3]
        %v190 = vld [vmem:[%s165] sm:$0xff]
        %v191 = vld [vmem:[%s165 + $0x8] sm:$0x3]
        %v192 = vld [vmem:[%s1] sm:$0xff]
        %v193 = vld [vmem:[%s1 + $0x8] sm:$0x3]
        %195 = vset.pattern.permute.xlu0 0
        %196 = vperm.xlu0 %195, %v192
        %v197 = vpop.permute.xlu0 %196
        %200 = vset.pattern.permute.xlu0 0
        %201 = vperm.xlu0 %200, %v193
        %v202 = vpop.permute.xlu0 %201
        %vm204 = vcmask 80896
        %v206 = vsel %vm204, %v188, 0
        %v209 = vsel %vm204, %v189, 0
        %vm211 = vcmask 1041408
        %v213 = vsel %vm211, %v191, 0
        %215 = vmatprep.subr.mxu0 0.0
        %216 = vmatpush1.msra.mxu0 %v190
        %217 = vmatprep.subr.mxu0 0.0
        %218 = vmatpush1.msra.mxu0 %v213
        %219 = vmatprep.subr.mxu0 0.0
        %220 = vmatpush1.msra.mxu0 0.0
        %221 = vmatprep.subr.mxu0 0.0
        %222 = vmatpush1.msra.mxu0 0.0
        %223 = vmatprep.subr.mxu0 0.0
        %224 = vmatpush1.msra.mxu0 0.0
        %225 = vmatprep.subr.mxu0 0.0
        %226 = vmatpush1.msra.mxu0 0.0
        %227 = vmatprep.subr.mxu0 0.0
        %228 = vmatpush1.msra.mxu0 0.0
        %229 = vmatprep.subr.mxu0 0.0
        %230 = vmatpush1.msra.mxu0 0.0
        %231 = vmatprep.subr.mxu0 0.0
        %232 = vmatpush1.msra.mxu0 0.0
        %233 = vmatprep.subr.mxu0 0.0
        %234 = vmatpush1.msra.mxu0 0.0
        %235 = vmatprep.subr.mxu0 0.0
        %236 = vmatpush1.msra.mxu0 0.0
        %237 = vmatprep.subr.mxu0 0.0
        %238 = vmatpush1.msra.mxu0 0.0
        %239 = vmatprep.subr.mxu0 0.0
        %240 = vmatpush1.msra.mxu0 0.0
        %241 = vmatprep.subr.mxu0 0.0
        %242 = vmatpush1.msra.mxu0 0.0
        %243 = vmatprep.subr.mxu0 0.0
        %244 = vmatpush1.msra.mxu0 0.0
        %245 = vmatprep.subr.mxu0 0.0
        %246 = vmatpush1.msra.mxu0 0.0
        %247 = vmatprep.subr.mxu0 0.0
        %248 = vmatpush1.msra.mxu0 0.0
        %249 = vmatprep.subr.mxu0 0.0
        %250 = vmatpush1.msra.mxu0 0.0
        %251 = vmatprep.subr.mxu0 0.0
        %252 = vmatpush1.msra.mxu0 0.0
        %253 = vmatprep.subr.mxu0 0.0
        %254 = vmatpush1.msra.mxu0 0.0
        %255 = vmatprep.subr.mxu0 0.0
        %256 = vmatpush1.msra.mxu0 0.0
        %257 = vmatprep.subr.mxu0 0.0
        %258 = vmatpush1.msra.mxu0 0.0
        %259 = vmatprep.subr.mxu0 0.0
        %260 = vmatpush1.msra.mxu0 0.0
        %261 = vmatprep.subr.mxu0 0.0
        %262 = vmatpush1.msra.mxu0 0.0
        %263 = vmatprep.subr.mxu0 0.0
        %264 = vmatpush1.msra.mxu0 0.0
        %265 = vmatprep.subr.mxu0 0.0
        %266 = vmatpush1.msra.mxu0 0.0
        %267 = vmatprep.subr.mxu0 0.0
        %268 = vmatpush1.msra.mxu0 0.0
        %269 = vmatprep.subr.mxu0 0.0
        %270 = vmatpush1.msra.mxu0 0.0
        %271 = vmatprep.subr.mxu0 0.0
        %272 = vmatpush1.msra.mxu0 0.0
        %273 = vmatprep.subr.mxu0 0.0
        %274 = vmatpush1.msra.mxu0 0.0
        %275 = vmatprep.subr.mxu0 0.0
        %276 = vmatpush1.msra.mxu0 0.0
        %277 = vmatprep.subr.mxu0 0.0
        %278 = vmatpush1.msra.mxu0 0.0
        %279 = vmatprep.mubr.f32.mxu0 0.0
        %280 = vmatmul.mubr.f32.gmra.mrb[0].mxu0 %v206
        %v281 = vpop.f32.mrb[0].mxu0
        %v282 = vadd.f32 %v197, %v281
        %v283 = vpop.f32.mrb[0].mxu0
        %284 = vmatprep.mubr.f32.mxu0 0.0
        %285 = vmatmul.mubr.f32.gmra.mrb[0].mxu0 %v209
        %v286 = vpop.f32.mrb[0].mxu0
        %v287 = vadd.f32 %v202, %v286
        %v288 = vpop.f32.mrb[0].mxu0
        %289 = vdwg.mxu0
        %290 = vst [vmem:[%s187] sm:$0xff] %v282
        %291 = vst [vmem:[%s187 + $0x8] sm:$0x3] %v287
        %s292 = sand.u32 %s96, 1
        %s293 = scalar_lea.sflag [#allocation4], %s292
        %s294 = sand.u32 %s96, 1
        %s295 = smul.addr %s294, 16
        %s296 = scalar_lea.vmem [#allocation5], %s295
        // Predicated region
        $region37: #{tpu_custom_call.1} parent=31 // pred_check
          %p297 = pneg %p106
        $region38: #{tpu_custom_call.1} parent=31 // pred_check_branch
          %299 = sbr.rel (%p297) target = $region40
        $region39: #{tpu_custom_call.1} parent=31 // pred_region
          %s301 = ssub.s32 256, 256
          %302 = vsyncadd %s293, %s301
          %s303 = smul.addr %s20, 128
          %s304 = scalar_lea.hbm %s3, %s303
          %s305 = sshll.u32 %s296, 4
          %s306 = int_to_ptr.vmem [resolvable:$true] %s305
          %311 = dma.vmem_to_hbm [thread:$0]  %s306, 256, %s304, %s293, 128, 256, 8
        $region40: #{tpu_custom_call.1} parent=31 // pred_fallthru
          _
      $region32: #{tpu_custom_call.1} parent=5 // pred_fallthru
        _
      %p312 = scmp.le.s32.totalorder 2, %s15
      // Predicated region
      $region41: #{tpu_custom_call.1} parent=5 // pred_check
        %p313 = pneg %p312
      $region42: #{tpu_custom_call.1} parent=5 // pred_check_branch
        %315 = sbr.rel (%p313) target = $region44
      $region43: #{tpu_custom_call.1} parent=5 // pred_region
        %s316 = ssub.s32 %s15, 2
        // Predicated region
        $region45: #{tpu_custom_call.1} parent=43 // pred_check
          %p317 = pneg %p112
        $region46: #{tpu_custom_call.1} parent=43 // pred_check_branch
          %319 = sbr.rel (%p317) target = $region48
        $region47: #{tpu_custom_call.1} parent=43 // pred_region
          %s320 = sand.u32 %s97, 1
          %s321 = scalar_lea.sflag [#allocation4], %s320
          %s322 = sand.u32 %s97, 1
          %s323 = smul.addr %s322, 16
          %s324 = scalar_lea.vmem [#allocation5], %s323
          %325 = dma.done %s321, 256
        $region48: #{tpu_custom_call.1} parent=43 // pred_fallthru
          _
      $region44: #{tpu_custom_call.1} parent=5 // pred_fallthru
        _
    $region6: #{tpu_custom_call.1} parent=1 // loop_footer
      %s19 = sadd.s32 1, %s15
    $region7: #{tpu_custom_call.1} parent=1 // loop_footer_branch
      %14 = sbr.rel target = $region3
    $region8: #{tpu_custom_call.1} parent=1 // loop_exit
      _
    %326 = vsyncpa [#allocation3], 1
    %s327 = scalar_lea.sflag [#allocation3], 1
    %328 = vsyncpa %s327, 1
    %329 = vsyncpa [#allocation4], 1
    %s330 = scalar_lea.sflag [#allocation4], 1
    %331 = vsyncpa %s330, 1

</llo_original>
